<compile_context>
chip_gen: v7x
topology: tpu7x:2x2x1
jax: 0.10.0
libtpu: 0.0.40
codegen_flags: <defaults>
</compile_context>

<pallas_src>
import math

import jax
import jax.numpy as jnp
from jax.experimental import pallas as pl
from jax.experimental.pallas import tpu as pltpu

MIN_NORM = 1e-15
BALL_EPS = 4e-3          # geoopt float32 ball projection eps
C = 1.0                  # PoincareBall curvature
SQRT_C = math.sqrt(C)
INV_SQRT_C = 1.0 / SQRT_C


def _round_up(n, m):
    return ((n + m - 1) // m) * m


def _safe_norm(v):
    return jnp.maximum(jnp.sqrt(jnp.sum(v * v, axis=-1, keepdims=True)), MIN_NORM)


def _artanh(z):
    # geoopt clamps the artanh argument away from +/-1
    z = jnp.clip(z, -1.0 + 1e-7, 1.0 - 1e-7)
    return 0.5 * jnp.log((1.0 + z) / (1.0 - z))


def _project_to_ball(y):
    maxnorm = (1.0 - BALL_EPS) / SQRT_C
    n = _safe_norm(y)
    return jnp.where(n > maxnorm, y / n * maxnorm, y)


# ---------------------------------------------------------------------------
# Hoisted (runs once per forward, plain JAX): effective transported weight.
#   W_eff = _weight * (1 - c * ||project(expmap0(_weight * _bias))||^2)
# ---------------------------------------------------------------------------
def _effective_weight(weight, bias):
    wb = weight * bias                                      # (OUT, IN)
    wb_norm = _safe_norm(wb)
    bias_pt = jnp.tanh(SQRT_C * wb_norm) * INV_SQRT_C * (wb / wb_norm)
    bias_pt = _project_to_ball(bias_pt)
    bsq = jnp.sum(bias_pt * bias_pt, axis=-1, keepdims=True)
    return weight * jnp.maximum(1.0 - C * bsq, MIN_NORM)    # (OUT, IN)


# ---------------------------------------------------------------------------
# Pallas kernel: batched mobius_matvec with precomputed, pre-transposed W_eff.
# ---------------------------------------------------------------------------
def _mobius_matvec_kernel(mt_ref, x_ref, o_ref):
    # mt_ref: (IN_P, OUT_P) effective weight, transposed, resident across grid
    # x_ref : (TB, IN_P)    batch tile of input points (zero-padded columns)
    # o_ref : (TB, OUT_P)   lane-dense output tile
    x = x_ref[...]
    xf = x.astype(jnp.float32)

    # MXU: (TB, IN_P) @ (IN_P, OUT_P), f32 accumulation.
    mx = jnp.dot(x, mt_ref[...], preferred_element_type=jnp.float32)

    # Per-row norms (XLU reductions), clamped like geoopt.
    x_sq = jnp.sum(xf * xf, axis=-1, keepdims=True)
    x_norm = jnp.maximum(jnp.sqrt(x_sq), MIN_NORM)
    mx_sq = jnp.sum(mx * mx, axis=-1, keepdims=True)
    mx_norm = jnp.maximum(jnp.sqrt(mx_sq), MIN_NORM)

    inv_x_norm = pl.reciprocal(x_norm, approx=True)      # EUP slot
    inv_mx_norm = pl.reciprocal(mx_norm, approx=True)    # EUP slot

    # mobius_matvec: tanh(||Mx||/||x|| * artanh(sqrt(c)||x||))/sqrt(c) * Mx/||Mx||
    arg = (mx_norm * inv_x_norm) * _artanh(SQRT_C * x_norm)

    # res = scale * (Mx / ||Mx||) with scale >= 0, so ||res|| == scale and the
    # ball projection collapses to clamping the per-row scale (no extra
    # full-width reduction / select needed).
    maxnorm = (1.0 - BALL_EPS) * INV_SQRT_C
    scale = jnp.minimum(jnp.tanh(arg) * INV_SQRT_C, maxnorm)        # (TB, 1)
    # all-zero rows -> 0; mask applied to the per-row scale (cheap select)
    scale = jnp.where(mx_sq == 0.0, 0.0, scale)

    o_ref[...] = ((scale * inv_mx_norm) * mx).astype(o_ref.dtype)


# ---------------------------------------------------------------------------
# Wrapper: hoist W_eff, pad to lane-dense / tile-aligned shapes, tile the batch.
# ---------------------------------------------------------------------------
def mobius_layer(x, weight, bias, *, tb=256, use_bf16_matmul=False):
    B, IN = x.shape
    OUT = weight.shape[0]
    orig_dtype = x.dtype

    # Hoisted: compute the transported effective weight once, pre-transposed
    # to (IN, OUT) so the kernel matmul is in the MXU's native layout.
    m_t = _effective_weight(weight.astype(jnp.float32),
                            bias.astype(jnp.float32)).T       # (IN, OUT)

    x_mm = x.astype(jnp.float32)
    if use_bf16_matmul:
        # v6e/v7x option: bf16 MXU operands, f32 accumulation; activation math
        # inside the kernel stays f32.
        m_t = m_t.astype(jnp.bfloat16)
        x_mm = x_mm.astype(jnp.bfloat16)

    # Lane/sublane-aligned pads (zero pad does not perturb norms or the matmul):
    #   IN  -> multiple of 128 (lane dim of x tile, sublane dim of W_eff^T)
    #   OUT -> multiple of 128 (lane-dense unmasked vst on the output)
    in_p = _round_up(IN, 128)
    out_p = _round_up(OUT, 128)
    if in_p != IN:
        m_t = jnp.pad(m_t, ((0, in_p - IN), (0, 0)))
        x_mm = jnp.pad(x_mm, ((0, 0), (0, in_p - IN)))
    if out_p != OUT:
        m_t = jnp.pad(m_t, ((0, 0), (0, out_p - OUT)))

    # Batch tile: multiple of 8 sublanes, capped at the (rounded-up) batch size.
    tb = _round_up(max(8, min(tb, _round_up(B, 8))), 8)
    b_p = _round_up(B, tb)
    if b_p != B:
        x_mm = jnp.pad(x_mm, ((0, b_p - B), (0, 0)))   # zero rows -> zero output

    out = pl.pallas_call(
        _mobius_matvec_kernel,
        out_shape=jax.ShapeDtypeStruct((b_p, out_p), orig_dtype),
        grid_spec=pltpu.PrefetchScalarGridSpec(
            num_scalar_prefetch=0,
            grid=(b_p // tb,),
            in_specs=[
                # W_eff^T kept fully resident across the batch grid.
                # TODO(synk): for very large OUT*IN (v7x 64 MiB VMEM) add an OUT
                # grid axis instead of keeping the whole weight resident.
                pl.BlockSpec((in_p, out_p), lambda i: (0, 0)),
                pl.BlockSpec((tb, in_p), lambda i: (i, 0)),     # x tile over batch
            ],
            out_specs=pl.BlockSpec((tb, out_p), lambda i: (i, 0)),
        ),
        compiler_params=pltpu.CompilerParams(
            dimension_semantics=("parallel",),
            vmem_limit_bytes=32 * 1024 * 1024,
        ),
    )(m_t, x_mm)

    return out[:B, :OUT]


# ---------------------------------------------------------------------------
# Pure-JAX reference (exact math, no approx reciprocals, full projection).
# ---------------------------------------------------------------------------
def mobius_layer_ref(x, weight, bias):
    m = _effective_weight(weight, bias)                     # (OUT, IN)
    x_norm = _safe_norm(x)
    mx = x @ m.T
    mx_norm = _safe_norm(mx)
    res_c = (jnp.tanh(mx_norm / x_norm * _artanh(SQRT_C * x_norm)) * INV_SQRT_C
             * (mx / mx_norm))
    all_zero = jnp.sum(jnp.abs(mx), axis=-1, keepdims=True) == 0.0
    res = jnp.where(all_zero, 0.0, res_c)
    return _project_to_ball(res)


if __name__ == "__main__":
    B, IN, OUT = 16, 32, 16

    key = jax.random.PRNGKey(0)
    kw, kb, kx = jax.random.split(key, 3)

    # Deterministic init mirroring reset_parameters():
    #   kaiming_normal_(a=sqrt(5)) -> std = sqrt(2/(1+5)) / sqrt(fan_in)
    std = math.sqrt(2.0 / 6.0) / math.sqrt(IN)
    weight = std * jax.random.normal(kw, (OUT, IN), jnp.float32)
    #   uniform(-4/sqrt(fan_in), 4/sqrt(fan_in))
    bound = 4.0 / math.sqrt(IN)
    bias = jax.random.uniform(kb, (OUT, 1), jnp.float32,
                              minval=-bound, maxval=bound)

    # Input points inside the Poincare ball (norm < 1)
    xr = jax.random.normal(kx, (B, IN), jnp.float32)
    x = 0.3 * xr / (1.0 + jnp.linalg.norm(xr, axis=-1, keepdims=True))

    out = mobius_layer(x, weight, bias)
    jax.block_until_ready(out)

    ref = mobius_layer_ref(x, weight, bias)
    assert out.shape == (B, OUT)
    # Tolerance accounts for the EUP approximate reciprocals in the kernel.
    assert jnp.allclose(out, ref, atol=2e-3, rtol=2e-3), "mismatch vs JAX reference"

    print("KERNEL_OK")
</pallas_src>

<mosaic_0001>
module attributes {stable_mosaic.version = 11 : i64} {
  func.func @_mobius_matvec_kernel(%arg0: i32, %arg1: memref<128x128xf32, #tpu.memory_space<vmem>>, %arg2: memref<16x128xf32, #tpu.memory_space<vmem>>, %arg3: memref<16x128xf32, #tpu.memory_space<vmem>>) attributes {dimension_semantics = [#tpu.dimension_semantics<parallel>], iteration_bounds = array<i64: 1>, scalar_prefetch = 0 : i64, scratch_operands = 0 : i64, tpu.core_type = #tpu.core_type<tc>, window_params = [{pipeline_mode = #tpu.pipeline_mode<synchronous>, transform_indices = @transform_0, window_bounds = array<i64: 128, 128>}, {transform_indices = @transform_1, window_bounds = array<i64: 16, 128>}, {transform_indices = @transform_2, window_bounds = array<i64: 16, 128>}]} {
    %c0 = arith.constant 0 : index
    %c0_0 = arith.constant 0 : index
    %0 = vector.load %arg2[%c0, %c0_0] : memref<16x128xf32, #tpu.memory_space<vmem>>, vector<16x128xf32>
    %c0_1 = arith.constant 0 : index
    %c0_2 = arith.constant 0 : index
    %1 = vector.load %arg1[%c0_1, %c0_2] : memref<128x128xf32, #tpu.memory_space<vmem>>, vector<128x128xf32>
    %cst = arith.constant dense<0.000000e+00> : vector<16x128xf32>
    %2 = tpu.matmul %0, %1, %cst {dimension_numbers = #tpu.dot_dimension_numbers<[1], [0], [0], [1], [0, 0, 1, 1], [], []>} : vector<16x128xf32>, vector<128x128xf32>, vector<16x128xf32> -> vector<16x128xf32>
    %3 = arith.mulf %0, %0 : vector<16x128xf32>
    %cst_3 = arith.constant dense<0.000000e+00> : vector<16xf32>
    %4 = vector.multi_reduction <add>, %3, %cst_3 [1] : vector<16x128xf32> to vector<16xf32>
    %5 = vector.shape_cast %4 : vector<16xf32> to vector<16x1xf32>
    %6 = math.sqrt %5 : vector<16x1xf32>
    %cst_4 = arith.constant 1.000000e-15 : f32
    %7 = vector.broadcast %cst_4 : f32 to vector<16x1xf32>
    %8 = arith.maximumf %6, %7 : vector<16x1xf32>
    %9 = arith.mulf %2, %2 : vector<16x128xf32>
    %cst_5 = arith.constant dense<0.000000e+00> : vector<16xf32>
    %10 = vector.multi_reduction <add>, %9, %cst_5 [1] : vector<16x128xf32> to vector<16xf32>
    %11 = vector.shape_cast %10 : vector<16xf32> to vector<16x1xf32>
    %12 = math.sqrt %11 : vector<16x1xf32>
    %cst_6 = arith.constant 1.000000e-15 : f32
    %13 = vector.broadcast %cst_6 : f32 to vector<16x1xf32>
    %14 = arith.maximumf %12, %13 : vector<16x1xf32>
    %15 = tpu.reciprocal %8 {approx = true} : vector<16x1xf32> -> vector<16x1xf32>
    %16 = tpu.reciprocal %14 {approx = true} : vector<16x1xf32> -> vector<16x1xf32>
    %17 = arith.mulf %14, %15 : vector<16x1xf32>
    %cst_7 = arith.constant 1.000000e+00 : f32
    %18 = vector.broadcast %cst_7 : f32 to vector<16x1xf32>
    %19 = arith.mulf %18, %8 : vector<16x1xf32>
    %cst_8 = arith.constant -0.99999988 : f32
    %cst_9 = arith.constant 0.99999988 : f32
    %20 = vector.broadcast %cst_8 : f32 to vector<16x1xf32>
    %21 = arith.maximumf %20, %19 : vector<16x1xf32>
    %22 = vector.broadcast %cst_9 : f32 to vector<16x1xf32>
    %23 = arith.minimumf %22, %21 : vector<16x1xf32>
    %cst_10 = arith.constant 1.000000e+00 : f32
    %24 = vector.broadcast %cst_10 : f32 to vector<16x1xf32>
    %25 = arith.addf %24, %23 : vector<16x1xf32>
    %cst_11 = arith.constant 1.000000e+00 : f32
    %26 = vector.broadcast %cst_11 : f32 to vector<16x1xf32>
    %27 = arith.subf %26, %23 : vector<16x1xf32>
    %28 = arith.divf %25, %27 : vector<16x1xf32>
    %29 = math.log %28 : vector<16x1xf32>
    %cst_12 = arith.constant 5.000000e-01 : f32
    %30 = vector.broadcast %cst_12 : f32 to vector<16x1xf32>
    %31 = arith.mulf %30, %29 : vector<16x1xf32>
    %32 = arith.mulf %17, %31 : vector<16x1xf32>
    %33 = math.tanh %32 : vector<16x1xf32>
    %cst_13 = arith.constant 1.000000e+00 : f32
    %34 = vector.broadcast %cst_13 : f32 to vector<16x1xf32>
    %35 = arith.mulf %33, %34 : vector<16x1xf32>
    %cst_14 = arith.constant 0.995999991 : f32
    %36 = vector.broadcast %cst_14 : f32 to vector<16x1xf32>
    %37 = arith.minimumf %35, %36 : vector<16x1xf32>
    %cst_15 = arith.constant 0.000000e+00 : f32
    %38 = vector.broadcast %cst_15 : f32 to vector<16x1xf32>
    %39 = arith.cmpf oeq, %11, %38 : vector<16x1xf32>
    %cst_16 = arith.constant 0.000000e+00 : f32
    %40 = vector.broadcast %cst_16 : f32 to vector<16x1xf32>
    %41 = arith.select %39, %40, %37 : vector<16x1xi1>, vector<16x1xf32>
    %42 = arith.mulf %41, %16 : vector<16x1xf32>
    %43 = vector.broadcast %42 : vector<16x1xf32> to vector<16x128xf32>
    %44 = arith.mulf %43, %2 : vector<16x128xf32>
    %c0_17 = arith.constant 0 : index
    %c0_18 = arith.constant 0 : index
    %45 = vector.load %arg3[%c0_17, %c0_18] : memref<16x128xf32, #tpu.memory_space<vmem>>, vector<16x128xf32>
    tpu.vector_store %arg3[%c0_17, %c0_18], %44 {strides = array<i32>} : memref<16x128xf32, #tpu.memory_space<vmem>>, vector<16x128xf32>,
    return
  }
  func.func @transform_0(%arg0: i32) -> (i32, i32) {
    %c0_i32 = arith.constant 0 : i32
    %c0_i32_0 = arith.constant 0 : i32
    %c0_i32_1 = arith.constant 0 : i32
    return %c0_i32, %c0_i32_0 : i32, i32
  }
  func.func @transform_1(%arg0: i32) -> (i32, i32) {
    %c0_i32 = arith.constant 0 : i32
    %c0_i32_0 = arith.constant 0 : i32
    return %arg0, %c0_i32 : i32, i32
  }
  func.func @transform_2(%arg0: i32) -> (i32, i32) {
    %c0_i32 = arith.constant 0 : i32
    %c0_i32_0 = arith.constant 0 : i32
    return %arg0, %c0_i32 : i32, i32
  }
}

</mosaic_0001>

<llo_original>
// kernel: tpu_custom_call.1
$region0: #{tpu_custom_call.1}
  #allocation0 [shape = 'u32[]', space=smem, size = 0x4, offset = 0x4, fixed_abs, tag = 'smem constant byte address 0x4 - core index']
  #allocation1 [shape = 'u32[144,128]{1,0:T(1,128)}', space=vmem, size = 0x12000, scoped, tag = 'internal scratch']
  %s0 = inlined_call_operand.hbm [shape: f32[128,128], index: 0, kind: input, shape index: {}]
  %s1 = inlined_call_operand.hbm [shape: f32[16,128], index: 1, kind: input, shape index: {}]
  %s2 = inlined_call_operand.hbm [shape: f32[16,128], index: 2, kind: output, shape index: {}]
  %s3 = sld [smem:[#allocation0]]
  $region26: #{tpu_custom_call.1} parent=0
    _
  %s5 = ssub.s32 1, %s3
  %s6 = scalar_select 0, %s5, %s3
  $region1: #{tpu_custom_call.1} parent=0
    #allocation2 [shape = 'u8[65536]{0}', space=vmem, size = 0x10000, scoped, tag = 'input window, operand 0, single buffered']
    #allocation3 [shape = 's32[1]{0}', space=sflag, size = 0x4, scoped, tag = 'scoped memory for tpu_custom_call.1']
    #allocation4 [shape = 's32[1]{0}', space=sflag, size = 0x4, scoped, tag = 'scoped memory for tpu_custom_call.1']
    #allocation5 [shape = 'u8[8192]{0}', space=vmem, size = 0x2000, scoped, tag = 'input window, operand 1, single buffered']
    #allocation6 [shape = 's32[1]{0}', space=sflag, size = 0x4, scoped, tag = 'scoped memory for tpu_custom_call.1']
    #allocation7 [shape = 'u8[8192]{0}', space=vmem, size = 0x2000, scoped, tag = 'output window, operand 0, single buffered']
    %7 = vsyncpa [#allocation3], 0
    %8 = vsyncpa [#allocation6], 0
    %9 = vsyncpa [#allocation4], 0
    // Predicated region
    $region2: #{tpu_custom_call.1} parent=1 // pred_check
      _
    $region3: #{tpu_custom_call.1} parent=1 // pred_check_branch
      %11 = sbr.rel (0) target = $region5
    $region4: #{tpu_custom_call.1} parent=1 // pred_region
      %s13 = ssub.s32 2048, 2048
      %14 = vsyncadd [#allocation3], %s13
      %s15 = sshll.u32 [#allocation2], 4
      %s16 = int_to_ptr.vmem [resolvable:$true] %s15
      %21 = dma.hbm_to_vmem [thread:$0]  %s0, 2048, %s16, [#allocation3], 128, 128, 8
    $region5: #{tpu_custom_call.1} parent=1 // pred_fallthru
      _
    // Predicated region
    $region6: #{tpu_custom_call.1} parent=1 // pred_check
      _
    $region7: #{tpu_custom_call.1} parent=1 // pred_check_branch
      %23 = sbr.rel (0) target = $region9
    $region8: #{tpu_custom_call.1} parent=1 // pred_region
      %s25 = ssub.s32 256, 256
      %26 = vsyncadd [#allocation6], %s25
      %s27 = sshll.u32 [#allocation5], 4
      %s28 = int_to_ptr.vmem [resolvable:$true] %s27
      %33 = dma.hbm_to_vmem [thread:$0]  %s1, 256, %s28, [#allocation6], 128, 128, 8
    $region9: #{tpu_custom_call.1} parent=1 // pred_fallthru
      _
    // Predicated region
    $region10: #{tpu_custom_call.1} parent=1 // pred_check
      _
    $region11: #{tpu_custom_call.1} parent=1 // pred_check_branch
      %35 = sbr.rel (0) target = $region13
    $region12: #{tpu_custom_call.1} parent=1 // pred_region
      %36 = dma.done [#allocation3], 2048
    $region13: #{tpu_custom_call.1} parent=1 // pred_fallthru
      _
    // Predicated region
    $region14: #{tpu_custom_call.1} parent=1 // pred_check
      _
    $region15: #{tpu_custom_call.1} parent=1 // pred_check_branch
      %38 = sbr.rel (0) target = $region17
    $region16: #{tpu_custom_call.1} parent=1 // pred_region
      %39 = dma.done [#allocation6], 256
    $region17: #{tpu_custom_call.1} parent=1 // pred_fallthru
      _
    %v40 = vld [vmem:[#allocation5] sm:$0xff]
    %v41 = vld [vmem:[#allocation5 + $0x8] sm:$0xff]
    %v42 = vld [vmem:[#allocation2] sm:$0xff]
    %v43 = vld [vmem:[#allocation2 + $0x8] sm:$0xff]
    %v44 = vld [vmem:[#allocation2 + $0x10] sm:$0xff]
    %v45 = vld [vmem:[#allocation2 + $0x18] sm:$0xff]
    %v46 = vld [vmem:[#allocation2 + $0x20] sm:$0xff]
    %v47 = vld [vmem:[#allocation2 + $0x28] sm:$0xff]
    %v48 = vld [vmem:[#allocation2 + $0x30] sm:$0xff]
    %v49 = vld [vmem:[#allocation2 + $0x38] sm:$0xff]
    %v50 = vld [vmem:[#allocation2 + $0x40] sm:$0xff]
    %v51 = vld [vmem:[#allocation2 + $0x48] sm:$0xff]
    %v52 = vld [vmem:[#allocation2 + $0x50] sm:$0xff]
    %v53 = vld [vmem:[#allocation2 + $0x58] sm:$0xff]
    %v54 = vld [vmem:[#allocation2 + $0x60] sm:$0xff]
    %v55 = vld [vmem:[#allocation2 + $0x68] sm:$0xff]
    %v56 = vld [vmem:[#allocation2 + $0x70] sm:$0xff]
    %v57 = vld [vmem:[#allocation2 + $0x78] sm:$0xff]
    %58 = vmatprep.subr.mxu0 0.0
    %59 = vmatpush1.msra.mxu0 %v42
    %60 = vmatprep.subr.mxu0 0.0
    %61 = vmatpush1.msra.mxu0 %v43
    %62 = vmatprep.subr.mxu0 0.0
    %63 = vmatpush1.msra.mxu0 %v44
    %64 = vmatprep.subr.mxu0 0.0
    %65 = vmatpush1.msra.mxu0 %v45
    %66 = vmatprep.subr.mxu0 0.0
    %67 = vmatpush1.msra.mxu0 %v46
    %68 = vmatprep.subr.mxu0 0.0
    %69 = vmatpush1.msra.mxu0 %v47
    %70 = vmatprep.subr.mxu0 0.0
    %71 = vmatpush1.msra.mxu0 %v48
    %72 = vmatprep.subr.mxu0 0.0
    %73 = vmatpush1.msra.mxu0 %v49
    %74 = vmatprep.subr.mxu0 0.0
    %75 = vmatpush1.msra.mxu0 %v50
    %76 = vmatprep.subr.mxu0 0.0
    %77 = vmatpush1.msra.mxu0 %v51
    %78 = vmatprep.subr.mxu0 0.0
    %79 = vmatpush1.msra.mxu0 %v52
    %80 = vmatprep.subr.mxu0 0.0
    %81 = vmatpush1.msra.mxu0 %v53
    %82 = vmatprep.subr.mxu0 0.0
    %83 = vmatpush1.msra.mxu0 %v54
    %84 = vmatprep.subr.mxu0 0.0
    %85 = vmatpush1.msra.mxu0 %v55
    %86 = vmatprep.subr.mxu0 0.0
    %87 = vmatpush1.msra.mxu0 %v56
    %88 = vmatprep.subr.mxu0 0.0
    %89 = vmatpush1.msra.mxu0 %v57
    %90 = vmatprep.subr.mxu0 0.0
    %91 = vmatpush1.msra.mxu0 0.0
    %92 = vmatprep.subr.mxu0 0.0
    %93 = vmatpush1.msra.mxu0 0.0
    %94 = vmatprep.subr.mxu0 0.0
    %95 = vmatpush1.msra.mxu0 0.0
    %96 = vmatprep.subr.mxu0 0.0
    %97 = vmatpush1.msra.mxu0 0.0
    %98 = vmatprep.subr.mxu0 0.0
    %99 = vmatpush1.msra.mxu0 0.0
    %100 = vmatprep.subr.mxu0 0.0
    %101 = vmatpush1.msra.mxu0 0.0
    %102 = vmatprep.subr.mxu0 0.0
    %103 = vmatpush1.msra.mxu0 0.0
    %104 = vmatprep.subr.mxu0 0.0
    %105 = vmatpush1.msra.mxu0 0.0
    %106 = vmatprep.subr.mxu0 0.0
    %107 = vmatpush1.msra.mxu0 0.0
    %108 = vmatprep.subr.mxu0 0.0
    %109 = vmatpush1.msra.mxu0 0.0
    %110 = vmatprep.subr.mxu0 0.0
    %111 = vmatpush1.msra.mxu0 0.0
    %112 = vmatprep.subr.mxu0 0.0
    %113 = vmatpush1.msra.mxu0 0.0
    %114 = vmatprep.subr.mxu0 0.0
    %115 = vmatpush1.msra.mxu0 0.0
    %116 = vmatprep.subr.mxu0 0.0
    %117 = vmatpush1.msra.mxu0 0.0
    %118 = vmatprep.subr.mxu0 0.0
    %119 = vmatpush1.msra.mxu0 0.0
    %120 = vmatprep.subr.mxu0 0.0
    %121 = vmatpush1.msra.mxu0 0.0
    %122 = vmatprep.mubr.f32.mxu0 0.0
    %123 = vmatmul.mubr.f32.gmra.mrb[0].mxu0 %v40
    %v124 = vpop.f32.mrb[0].mxu0
    %v125 = vadd.f32 0.0, %v124
    %v126 = vpop.f32.mrb[0].mxu0
    %127 = vmatprep.mubr.f32.mxu0 0.0
    %128 = vmatmul.mubr.f32.gmra.mrb[0].mxu0 %v41
    %v129 = vpop.f32.mrb[0].mxu0
    %v130 = vadd.f32 0.0, %v129
    %v131 = vpop.f32.mrb[0].mxu0
    %132 = vdwg.mxu0
    %v133 = vmul.f32 %v40, %v40
    %v134 = vmul.f32 %v41, %v41
    %135 = vadd.xlane.f32.xlu0 %v133
    %v136 = vpop.xlane.xlu0 %135
    %137 = vadd.xlane.f32.xlu0 %v134
    %v138 = vpop.xlane.xlu0 %137
    %v139 = vrsqrt.pop %v136
    %v140 = vmul.f32 %v136, %v139
    %vm141 = vcmp.eq.f32.partialorder %v136, inf
    %v142 = vsel %vm141, %v136, %v140
    %vm143 = vcmp.eq.f32.partialorder %v136, 0.0
    %v144 = vand.u32 %v136, 2147483648
    %v145 = vsel %vm143, %v144, %v142
    %v146 = vrsqrt.pop %v138
    %v147 = vmul.f32 %v138, %v146
    %vm148 = vcmp.eq.f32.partialorder %v138, inf
    %v149 = vsel %vm148, %v138, %v147
    %vm150 = vcmp.eq.f32.partialorder %v138, 0.0
    %v151 = vand.u32 %v138, 2147483648
    %v152 = vsel %vm150, %v151, %v149
    %v153 = vmax.f32 %v145, 1e-15
    %v154 = vmax.f32 %v152, 1e-15
    %v155 = vmul.f32 %v125, %v125
    %v156 = vmul.f32 %v130, %v130
    %157 = vadd.xlane.f32.xlu0 %v155
    %v158 = vpop.xlane.xlu0 %157
    %159 = vadd.xlane.f32.xlu0 %v156
    %v160 = vpop.xlane.xlu0 %159
    %v161 = vrsqrt.pop %v158
    %v162 = vmul.f32 %v158, %v161
    %vm163 = vcmp.eq.f32.partialorder %v158, inf
    %v164 = vsel %vm163, %v158, %v162
    %vm165 = vcmp.eq.f32.partialorder %v158, 0.0
    %v166 = vand.u32 %v158, 2147483648
    %v167 = vsel %vm165, %v166, %v164
    %v168 = vrsqrt.pop %v160
    %v169 = vmul.f32 %v160, %v168
    %vm170 = vcmp.eq.f32.partialorder %v160, inf
    %v171 = vsel %vm170, %v160, %v169
    %vm172 = vcmp.eq.f32.partialorder %v160, 0.0
    %v173 = vand.u32 %v160, 2147483648
    %v174 = vsel %vm172, %v173, %v171
    %v175 = vmax.f32 %v167, 1e-15
    %v176 = vmax.f32 %v174, 1e-15
    %v177 = vrcp.pop %v153
    %v178 = vrcp.pop %v154
    %v179 = vrcp.pop %v175
    %v180 = vrcp.pop %v176
    %v181 = vmul.f32 %v175, %v177
    %v182 = vmul.f32 %v176, %v178
    %v183 = vmax.f32 %v153, -0.9999999
    %v184 = vmax.f32 %v154, -0.9999999
    %v185 = vmin.f32 %v183, 0.9999999
    %v186 = vmin.f32 %v184, 0.9999999
    %v187 = vadd.f32 %v185, 1.0
    %v188 = vadd.f32 %v186, 1.0
    %v189 = vsub.f32 1.0, %v185
    %v190 = vsub.f32 1.0, %v186
    %v191 = vrcp.pop %v189
    %v192 = vmul.f32 %v187, %v191
    %v193 = vrcp.pop %v190
    %v194 = vmul.f32 %v188, %v193
    %v195 = vlog2.pop %v192
    %v196 = vmul.f32 %v195, 0.6931472
    %v197 = vlog2.pop %v194
    %v198 = vmul.f32 %v197, 0.6931472
    %v199 = vmul.f32 %v196, 0.5
    %v200 = vmul.f32 %v198, 0.5
    %v201 = vmul.f32 %v181, %v199
    %v202 = vmul.f32 %v182, %v200
    %v203 = vtanh.pop %v201
    %v204 = vtanh.pop %v202
    %v205 = vmin.f32 %v203, 0.996
    %v206 = vmin.f32 %v204, 0.996
    %vm207 = vcmp.eq.f32.partialorder %v158, 0.0
    %vm208 = vcmp.eq.f32.partialorder %v160, 0.0
    %v209 = vsel %vm207, 0.0, %v205
    %v210 = vsel %vm208, 0.0, %v206
    %v211 = vmul.f32 %v209, %v179
    %v212 = vmul.f32 %v210, %v180
    %v213 = vmul.f32 %v211, %v125
    %v214 = vmul.f32 %v212, %v130
    %215 = vst [vmem:[#allocation7] sm:$0xff] %v213
    %216 = vst [vmem:[#allocation7 + $0x8] sm:$0xff] %v214
    // Predicated region
    $region18: #{tpu_custom_call.1} parent=1 // pred_check
      _
    $region19: #{tpu_custom_call.1} parent=1 // pred_check_branch
      %218 = sbr.rel (0) target = $region21
    $region20: #{tpu_custom_call.1} parent=1 // pred_region
      %s220 = ssub.s32 256, 256
      %221 = vsyncadd [#allocation4], %s220
      %s222 = sshll.u32 [#allocation7], 4
      %s223 = int_to_ptr.vmem [resolvable:$true] %s222
      %228 = dma.vmem_to_hbm [thread:$0]  %s223, 256, %s2, [#allocation4], 128, 128, 8
    $region21: #{tpu_custom_call.1} parent=1 // pred_fallthru
      _
    // Predicated region
    $region22: #{tpu_custom_call.1} parent=1 // pred_check
      _
    $region23: #{tpu_custom_call.1} parent=1 // pred_check_branch
      %230 = sbr.rel (0) target = $region25
    $region24: #{tpu_custom_call.1} parent=1 // pred_region
      %231 = dma.done [#allocation4], 256
    $region25: #{tpu_custom_call.1} parent=1 // pred_fallthru
      _
    %232 = vsyncpa [#allocation3], 1
    %233 = vsyncpa [#allocation6], 1
    %234 = vsyncpa [#allocation4], 1

</llo_original>
